<compile_context>
chip_gen: v7x
topology: tpu7x:2x2x1
jax: 0.10.0
libtpu: 0.0.40
codegen_flags: <defaults>
</compile_context>

<pallas_src>
import functools

import jax
import jax.numpy as jnp
from jax import lax
from jax.experimental import pallas as pl
from jax.experimental.pallas import tpu as pltpu


def _unet_down_kernel(p_ref, w_ref, o_ref, y_sc, s_sc, ss_sc, *,
                      eps, negative_slope):
    # p_ref : (K, TP)          compute dtype (bf16)  -- one P tile of patches
    # w_ref : (Cout, K)        compute dtype (bf16)
    # o_ref : (Cout, P)        output dtype, resident across the P-tile axis
    # y_sc  : (NPT, Cout, TP)  f32 scratch with the un-normalised conv output
    # s_sc  : (Cout, 1)        f32 running sum
    # ss_sc : (Cout, 1)        f32 running sum of squares
    pt = pl.program_id(1)
    npt = pl.num_programs(1)
    NPT, Cout, TP = y_sc.shape
    P = NPT * TP

    # Phase 1: conv tile as a matmul on the MXU (spatial TP on the lane-dense
    # N axis), f32 accumulation into the per-tile scratch slot.
    y = jnp.dot(w_ref[...], p_ref[...], preferred_element_type=jnp.float32)
    y_sc[pt] = y

    # Running InstanceNorm statistics, updated per tile (overlaps with the
    # prefetch of the next patch tile).
    @pl.when(pt == 0)
    def _():
        s_sc[...] = jnp.zeros_like(s_sc)
        ss_sc[...] = jnp.zeros_like(ss_sc)

    s_sc[...] = s_sc[...] + jnp.sum(y, axis=1, keepdims=True)
    ss_sc[...] = ss_sc[...] + jnp.sum(y * y, axis=1, keepdims=True)

    @pl.when(pt == npt - 1)
    def _():
        # Phase 2: InstanceNorm2d(affine=False, eps) + LeakyReLU over full P.
        inv_p = jnp.float32(1.0 / P)
        mean = s_sc[...] * inv_p
        var = jnp.maximum(ss_sc[...] * inv_p - mean * mean, 0.0)
        scale = lax.rsqrt(var + eps)              # EUP
        shift = mean * scale
        # Hoist the (Cout, TP) broadcasts out of the unrolled loop.
        scale_b = jnp.broadcast_to(scale, (Cout, TP))
        shift_b = jnp.broadcast_to(shift, (Cout, TP))
        for j in range(NPT):                      # static unroll, VMEM reads
            yn = y_sc[j] * scale_b - shift_b
            yn = jnp.where(yn >= 0, yn, negative_slope * yn)
            o_ref[:, j * TP:(j + 1) * TP] = yn.astype(o_ref.dtype)


def _choose_p_tile(P, K, itemsize, budget_bytes=8 * 1024 * 1024):
    # Largest multiple-of-128 divisor of P whose double-buffered (K, TP) input
    # tile fits the per-operand VMEM budget; tiny layers fall back to TP = P.
    for tp in (2048, 1024, 512, 256, 128):
        if P % tp == 0 and 2 * K * tp * itemsize <= budget_bytes:
            return tp
    return P


def unet_down(x, weight, *, normalization=True, eps=1e-5, negative_slope=0.2,
              compute_dtype=jnp.bfloat16):
    """UNetDown forward. x: (N, Cin, H, W) NCHW, weight: (Cout, Cin, 4, 4)."""
    assert normalization, "this module is instantiated with normalization=True"
    N, Cin, H, W = x.shape
    Cout = weight.shape[0]
    Hout, Wout = H // 2, W // 2
    P = Hout * Wout
    K = Cin * 4 * 4

    xc = x.astype(compute_dtype)
    wc = weight.astype(compute_dtype)

    # Fused patch gather: (N, Cin*16, Hout, Wout) with (ci, kh, kw) channel
    # ordering, which matches weight.reshape(Cout, Cin*16).
    # TODO(synk): for the largest layers, gather patches inside the kernel via
    # strided DMAs from an HBM-resident input (memory_space=pl.ANY) to avoid
    # the K-fold im2col HBM amplification entirely.
    patches = lax.conv_general_dilated_patches(
        xc, filter_shape=(4, 4), window_strides=(2, 2),
        padding=((1, 1), (1, 1)),
        dimension_numbers=("NCHW", "OIHW", "NCHW"),
    ).reshape(N, K, P)                              # (N, K, P): P on the lane axis
    w_mat = wc.reshape(Cout, K)                     # (Cout, K)

    comp_isz = jnp.dtype(compute_dtype).itemsize
    out_isz = jnp.dtype(x.dtype).itemsize
    TP = _choose_p_tile(P, K, comp_isz)
    NPT = P // TP

    # Explicit VMEM budget with headroom (v7x physical VMEM is only 64 MiB).
    est = (2 * K * TP * comp_isz          # double-buffered patch tiles
           + 2 * Cout * K * comp_isz      # weight
           + 2 * Cout * P * out_isz       # resident output block
           + NPT * Cout * TP * 4          # f32 conv scratch
           + 2 * Cout * 4)                # running stats
    vmem_limit = int(min(48 * 2**20, max(16 * 2**20, 2 * est)))

    kernel = functools.partial(_unet_down_kernel, eps=eps,
                               negative_slope=negative_slope)

    out = pl.pallas_call(
        kernel,
        out_shape=jax.ShapeDtypeStruct((N, Cout, P), x.dtype),
        grid_spec=pltpu.PrefetchScalarGridSpec(
            num_scalar_prefetch=0,
            grid=(N, NPT),
            in_specs=[
                pl.BlockSpec((None, K, TP), lambda n, pt: (n, 0, pt)),
                pl.BlockSpec((Cout, K), lambda n, pt: (0, 0)),
            ],
            out_specs=pl.BlockSpec((None, Cout, P), lambda n, pt: (n, 0, 0)),
            scratch_shapes=[
                pltpu.VMEM((NPT, Cout, TP), jnp.float32),
                pltpu.VMEM((Cout, 1), jnp.float32),
                pltpu.VMEM((Cout, 1), jnp.float32),
            ],
        ),
        compiler_params=pltpu.CompilerParams(
            dimension_semantics=("parallel", "arbitrary"),
            vmem_limit_bytes=vmem_limit),
    )(patches, w_mat)

    # (N, Cout, P) is already NCHW order -> reshape only.
    return out.reshape(N, Cout, Hout, Wout)


def _reference(x, weight, compute_dtype):
    # Pure-JAX reference of the PyTorch forward (eval mode, dropout=0), with
    # the same bf16 MXU-input cast as the kernel (f32 accumulation & stats).
    y = lax.conv_general_dilated(
        x.astype(compute_dtype), weight.astype(compute_dtype),
        window_strides=(2, 2), padding=((1, 1), (1, 1)),
        dimension_numbers=("NCHW", "OIHW", "NCHW"),
        preferred_element_type=jnp.float32)
    mean = jnp.mean(y, axis=(2, 3), keepdims=True)
    var = jnp.mean((y - mean) ** 2, axis=(2, 3), keepdims=True)
    y = (y - mean) * lax.rsqrt(var + 1e-5)
    y = jnp.where(y >= 0, y, 0.2 * y)
    return y.astype(x.dtype)


if __name__ == "__main__":
    key = jax.random.PRNGKey(0)
    kx, kw = jax.random.split(key)

    N, Cin, H, W = 2, 4, 16, 16
    Cout = 8

    x = jax.random.normal(kx, (N, Cin, H, W), dtype=jnp.float32)
    # nn.Conv2d(Cin, Cout, kernel_size=4, stride=2, padding=1, bias=False)
    weight = 0.1 * jax.random.normal(kw, (Cout, Cin, 4, 4), dtype=jnp.float32)

    out = unet_down(x, weight)
    jax.block_until_ready(out)

    ref = _reference(x, weight, jnp.bfloat16)
    assert out.shape == (N, Cout, H // 2, W // 2)
    assert jnp.allclose(out, ref, atol=1e-3, rtol=1e-3), \
        float(jnp.max(jnp.abs(out - ref)))

    print("KERNEL_OK")
</pallas_src>

<mosaic_0001>
module attributes {stable_mosaic.version = 11 : i64} {
  func.func @_unet_down_kernel(%arg0: i32, %arg1: i32, %arg2: memref<1x64x64xbf16, #tpu.memory_space<vmem>>, %arg3: memref<8x64xbf16, #tpu.memory_space<vmem>>, %arg4: memref<1x8x64xf32, #tpu.memory_space<vmem>>, %arg5: memref<1x8x64xf32, #tpu.memory_space<vmem>>, %arg6: memref<8x1xf32, #tpu.memory_space<vmem>>, %arg7: memref<8x1xf32, #tpu.memory_space<vmem>>) attributes {dimension_semantics = [#tpu.dimension_semantics<parallel>, #tpu.dimension_semantics<arbitrary>], iteration_bounds = array<i64: 2, 1>, scalar_prefetch = 0 : i64, scratch_operands = 3 : i64, tpu.core_type = #tpu.core_type<tc>, window_params = [{transform_indices = @transform_0, window_bounds = array<i64: 1, 64, 64>}, {pipeline_mode = #tpu.pipeline_mode<synchronous>, transform_indices = @transform_1, window_bounds = array<i64: 8, 64>}, {transform_indices = @transform_2, window_bounds = array<i64: 1, 8, 64>}]} {
    %c0 = arith.constant 0 : index
    %c0_0 = arith.constant 0 : index
    %0 = vector.load %arg3[%c0, %c0_0] : memref<8x64xbf16, #tpu.memory_space<vmem>>, vector<8x64xbf16>
    %c0_1 = arith.constant 0 : index
    %c0_2 = arith.constant 0 : index
    %c0_3 = arith.constant 0 : index
    %1 = vector.load %arg2[%c0_1, %c0_2, %c0_3] : memref<1x64x64xbf16, #tpu.memory_space<vmem>>, vector<1x64x64xbf16>
    %2 = vector.shape_cast %1 : vector<1x64x64xbf16> to vector<64x64xbf16>
    %cst = arith.constant dense<0.000000e+00> : vector<8x64xf32>
    %3 = tpu.matmul %0, %2, %cst {dimension_numbers = #tpu.dot_dimension_numbers<[1], [0], [0], [1], [0, 0, 1, 1], [], []>} : vector<8x64xbf16>, vector<64x64xbf16>, vector<8x64xf32> -> vector<8x64xf32>
    %4 = arith.index_cast %arg1 : i32 to index
    %c0_4 = arith.constant 0 : index
    %c0_5 = arith.constant 0 : index
    %5 = vector.load %arg5[%4, %c0_4, %c0_5] : memref<1x8x64xf32, #tpu.memory_space<vmem>>, vector<1x8x64xf32>
    %6 = vector.shape_cast %5 : vector<1x8x64xf32> to vector<8x64xf32>
    %7 = vector.shape_cast %3 : vector<8x64xf32> to vector<1x8x64xf32>
    tpu.vector_store %arg5[%4, %c0_4, %c0_5], %7 {strides = array<i32>} : memref<1x8x64xf32, #tpu.memory_space<vmem>>, vector<1x8x64xf32>,
    %c0_i32 = arith.constant 0 : i32
    %8 = arith.cmpi eq, %arg1, %c0_i32 : i32
    %9 = arith.extui %8 : i1 to i32
    %c0_i32_6 = arith.constant 0 : i32
    %10 = arith.cmpi ne, %9, %c0_i32_6 : i32
    scf.if %10 {
      %cst_19 = arith.constant 0.000000e+00 : f32
      %25 = vector.broadcast %cst_19 : f32 to vector<8x1xf32>
      %c0_20 = arith.constant 0 : index
      %c0_21 = arith.constant 0 : index
      %26 = vector.load %arg6[%c0_20, %c0_21] : memref<8x1xf32, #tpu.memory_space<vmem>>, vector<8x1xf32>
      tpu.vector_store %arg6[%c0_20, %c0_21], %25 {strides = array<i32>} : memref<8x1xf32, #tpu.memory_space<vmem>>, vector<8x1xf32>,
      %cst_22 = arith.constant 0.000000e+00 : f32
      %27 = vector.broadcast %cst_22 : f32 to vector<8x1xf32>
      %c0_23 = arith.constant 0 : index
      %c0_24 = arith.constant 0 : index
      %28 = vector.load %arg7[%c0_23, %c0_24] : memref<8x1xf32, #tpu.memory_space<vmem>>, vector<8x1xf32>
      tpu.vector_store %arg7[%c0_23, %c0_24], %27 {strides = array<i32>} : memref<8x1xf32, #tpu.memory_space<vmem>>, vector<8x1xf32>,
    } else {
    }
    %c0_7 = arith.constant 0 : index
    %c0_8 = arith.constant 0 : index
    %11 = vector.load %arg6[%c0_7, %c0_8] : memref<8x1xf32, #tpu.memory_space<vmem>>, vector<8x1xf32>
    %cst_9 = arith.constant dense<0.000000e+00> : vector<8xf32>
    %12 = vector.multi_reduction <add>, %3, %cst_9 [1] : vector<8x64xf32> to vector<8xf32>
    %13 = vector.shape_cast %12 : vector<8xf32> to vector<8x1xf32>
    %14 = arith.addf %11, %13 : vector<8x1xf32>
    %c0_10 = arith.constant 0 : index
    %c0_11 = arith.constant 0 : index
    %15 = vector.load %arg6[%c0_10, %c0_11] : memref<8x1xf32, #tpu.memory_space<vmem>>, vector<8x1xf32>
    tpu.vector_store %arg6[%c0_10, %c0_11], %14 {strides = array<i32>} : memref<8x1xf32, #tpu.memory_space<vmem>>, vector<8x1xf32>,
    %c0_12 = arith.constant 0 : index
    %c0_13 = arith.constant 0 : index
    %16 = vector.load %arg7[%c0_12, %c0_13] : memref<8x1xf32, #tpu.memory_space<vmem>>, vector<8x1xf32>
    %17 = arith.mulf %3, %3 : vector<8x64xf32>
    %cst_14 = arith.constant dense<0.000000e+00> : vector<8xf32>
    %18 = vector.multi_reduction <add>, %17, %cst_14 [1] : vector<8x64xf32> to vector<8xf32>
    %19 = vector.shape_cast %18 : vector<8xf32> to vector<8x1xf32>
    %20 = arith.addf %16, %19 : vector<8x1xf32>
    %c0_15 = arith.constant 0 : index
    %c0_16 = arith.constant 0 : index
    %21 = vector.load %arg7[%c0_15, %c0_16] : memref<8x1xf32, #tpu.memory_space<vmem>>, vector<8x1xf32>
    tpu.vector_store %arg7[%c0_15, %c0_16], %20 {strides = array<i32>} : memref<8x1xf32, #tpu.memory_space<vmem>>, vector<8x1xf32>,
    %c0_i32_17 = arith.constant 0 : i32
    %22 = arith.cmpi eq, %arg1, %c0_i32_17 : i32
    %23 = arith.extui %22 : i1 to i32
    %c0_i32_18 = arith.constant 0 : i32
    %24 = arith.cmpi ne, %23, %c0_i32_18 : i32
    scf.if %24 {
      %c0_19 = arith.constant 0 : index
      %c0_20 = arith.constant 0 : index
      %25 = vector.load %arg6[%c0_19, %c0_20] : memref<8x1xf32, #tpu.memory_space<vmem>>, vector<8x1xf32>
      %cst_21 = arith.constant 1.562500e-02 : f32
      %26 = vector.broadcast %cst_21 : f32 to vector<8x1xf32>
      %27 = arith.mulf %25, %26 : vector<8x1xf32>
      %c0_22 = arith.constant 0 : index
      %c0_23 = arith.constant 0 : index
      %28 = vector.load %arg7[%c0_22, %c0_23] : memref<8x1xf32, #tpu.memory_space<vmem>>, vector<8x1xf32>
      %cst_24 = arith.constant 1.562500e-02 : f32
      %29 = vector.broadcast %cst_24 : f32 to vector<8x1xf32>
      %30 = arith.mulf %28, %29 : vector<8x1xf32>
      %31 = arith.mulf %27, %27 : vector<8x1xf32>
      %32 = arith.subf %30, %31 : vector<8x1xf32>
      %cst_25 = arith.constant 0.000000e+00 : f32
      %33 = vector.broadcast %cst_25 : f32 to vector<8x1xf32>
      %34 = arith.maximumf %32, %33 : vector<8x1xf32>
      %cst_26 = arith.constant 9.99999974E-6 : f32
      %35 = vector.broadcast %cst_26 : f32 to vector<8x1xf32>
      %36 = arith.addf %34, %35 : vector<8x1xf32>
      %37 = math.rsqrt %36 : vector<8x1xf32>
      %38 = arith.mulf %27, %37 : vector<8x1xf32>
      %39 = vector.shape_cast %37 : vector<8x1xf32> to vector<8x1xf32>
      %40 = vector.broadcast %39 : vector<8x1xf32> to vector<8x64xf32>
      %41 = vector.shape_cast %38 : vector<8x1xf32> to vector<8x1xf32>
      %42 = vector.broadcast %41 : vector<8x1xf32> to vector<8x64xf32>
      %c0_27 = arith.constant 0 : index
      %c0_28 = arith.constant 0 : index
      %c0_29 = arith.constant 0 : index
      %43 = vector.load %arg5[%c0_27, %c0_28, %c0_29] : memref<1x8x64xf32, #tpu.memory_space<vmem>>, vector<1x8x64xf32>
      %44 = vector.shape_cast %43 : vector<1x8x64xf32> to vector<8x64xf32>
      %45 = arith.mulf %44, %40 : vector<8x64xf32>
      %46 = arith.subf %45, %42 : vector<8x64xf32>
      %cst_30 = arith.constant 0.000000e+00 : f32
      %47 = vector.broadcast %cst_30 : f32 to vector<8x64xf32>
      %48 = arith.cmpf oge, %46, %47 : vector<8x64xf32>
      %cst_31 = arith.constant 2.000000e-01 : f32
      %49 = vector.broadcast %cst_31 : f32 to vector<8x64xf32>
      %50 = arith.mulf %49, %46 : vector<8x64xf32>
      %51 = arith.select %48, %46, %50 : vector<8x64xi1>, vector<8x64xf32>
      %c0_32 = arith.constant 0 : index
      %c0_33 = arith.constant 0 : index
      %c0_34 = arith.constant 0 : index
      %52 = vector.load %arg4[%c0_32, %c0_33, %c0_34] : memref<1x8x64xf32, #tpu.memory_space<vmem>>, vector<1x8x64xf32>
      %53 = vector.shape_cast %52 : vector<1x8x64xf32> to vector<8x64xf32>
      %54 = vector.shape_cast %51 : vector<8x64xf32> to vector<1x8x64xf32>
      tpu.vector_store %arg4[%c0_32, %c0_33, %c0_34], %54 {strides = array<i32>} : memref<1x8x64xf32, #tpu.memory_space<vmem>>, vector<1x8x64xf32>,
    } else {
    }
    return
  }
  func.func @transform_0(%arg0: i32, %arg1: i32) -> (i32, i32, i32) {
    %c0_i32 = arith.constant 0 : i32
    %c0_i32_0 = arith.constant 0 : i32
    return %arg0, %c0_i32, %arg1 : i32, i32, i32
  }
  func.func @transform_1(%arg0: i32, %arg1: i32) -> (i32, i32) {
    %c0_i32 = arith.constant 0 : i32
    %c0_i32_0 = arith.constant 0 : i32
    %c0_i32_1 = arith.constant 0 : i32
    return %c0_i32, %c0_i32_0 : i32, i32
  }
  func.func @transform_2(%arg0: i32, %arg1: i32) -> (i32, i32, i32) {
    %c0_i32 = arith.constant 0 : i32
    %c0_i32_0 = arith.constant 0 : i32
    %c0_i32_1 = arith.constant 0 : i32
    return %arg0, %c0_i32, %c0_i32_0 : i32, i32, i32
  }
}

</mosaic_0001>

<llo_original>
// kernel: tpu_custom_call.1
$region0: #{tpu_custom_call.1}
  #allocation0 [shape = 'u32[]', space=smem, size = 0x4, offset = 0x4, fixed_abs, tag = 'smem constant byte address 0x4 - core index']
  #allocation1 [shape = 'u32[144,128]{1,0:T(1,128)}', space=vmem, size = 0x12000, scoped, tag = 'internal scratch']
  #allocation2 [shape = 'f32[1,8,64]{2,1,0:T(8,128)}', space=vmem, size = 0x1000, scoped, tag = 'scratch operand']
  #allocation3 [shape = 'f32[8,1]{1,0:T(8,128)}', space=vmem, size = 0x1000, scoped, tag = 'scratch operand']
  #allocation4 [shape = 'f32[8,1]{1,0:T(8,128)}', space=vmem, size = 0x1000, scoped, tag = 'scratch operand']
  %s0 = inlined_call_operand.hbm [shape: bf16[2,64,64], index: 0, kind: input, shape index: {}]
  %s1 = inlined_call_operand.hbm [shape: bf16[8,64], index: 1, kind: input, shape index: {}]
  %s2 = inlined_call_operand.hbm [shape: f32[2,8,64], index: 2, kind: output, shape index: {}]
  %s3 = sld [smem:[#allocation0]]
  $region57: #{tpu_custom_call.1} parent=0
    _
  %s5 = ssub.s32 1, %s3
  %s6 = scalar_select 0, %s5, %s3
  $region1: #{tpu_custom_call.1} parent=0
    #allocation5 [shape = 'u8[32768]{0}', space=vmem, size = 0x8000, scoped, tag = 'input window, operand 0']
    #allocation6 [shape = 's32[2]{0}', space=sflag, size = 0x8, scoped, tag = 'scoped memory for tpu_custom_call.1']
    #allocation7 [shape = 's32[2]{0}', space=sflag, size = 0x8, scoped, tag = 'scoped memory for tpu_custom_call.1']
    #allocation8 [shape = 'u8[2048]{0}', space=vmem, size = 0x800, scoped, tag = 'input window, operand 1, single buffered']
    #allocation9 [shape = 's32[1]{0}', space=sflag, size = 0x4, scoped, tag = 'scoped memory for tpu_custom_call.1']
    #allocation10 [shape = 'u8[8192]{0}', space=vmem, size = 0x2000, scoped, tag = 'output window, operand 0']
    %7 = vsyncpa [#allocation6], 0
    %s8 = scalar_lea.sflag [#allocation6], 1
    %9 = vsyncpa %s8, 0
    %10 = vsyncpa [#allocation9], 0
    %11 = vsyncpa [#allocation7], 0
    %s12 = scalar_lea.sflag [#allocation7], 1
    %13 = vsyncpa %s12, 0
    loop: start=0, step=1, limit=4
    $region2: #{tpu_custom_call.1} parent=1 // loop_pre_header
      _
    $region3: #{tpu_custom_call.1} parent=1 // loop_header
      %s15 = sphi 0, %s19
      %p16 = scmp.ge.s32.totalorder %s15, 4
      %s22 = sphi 0, %s34
      %s23 = sphi 0, %s30
      %s24 = sphi 0, %s22
      %s25 = sphi 0, %s23
      %s26 = sphi 0, %s24
      %s27 = sphi 0, %s25
      %s39 = sphi 0, %s41
      %s42 = sphi 0, %s39
      %s43 = sphi 0, %s42
      %s59 = sphi 0, %s43
      %s63 = sphi 0, %s63
      %s65 = sphi 0, %s63
      %s66 = sphi 0, %s65
      %s80 = sphi 0, %s66
      %s86 = sphi 0, %s88
      %s89 = sphi 0, %s86
      %s90 = sphi 0, %s89
      %s106 = sphi 0, %s90
    $region4: #{tpu_custom_call.1} parent=1 // loop_header_branch
      %18 = sbr.rel (%p16) target = $region8
    $region5: #{tpu_custom_call.1} parent=1 // loop_body
      %s20 = ssub.s32 %s15, 1
      %s21 = ssub.s32 %s15, 2
      %s28 = sadd.s32 1, %s23
      %p29 = scmp.ge.s32.totalorder %s28, 1
      %s30 = scalar_select %p29, 0, %s28
      %s31 = sadd.s32 1, %s22
      %s32 = scalar_select %p29, %s31, %s22
      %p33 = scmp.ge.s32.totalorder %s32, 2
      %s34 = scalar_select %p33, 0, %s32
      %s35 = ssub.s32 %s22, %s34
      %s36 = ssub.s32 %s23, %s30
      %s37 = sor.u32 %s35, %s36
      %p38 = scmp.eq.s32.totalorder %s37, 0
      %s40 = sadd.s32 %s39, 1
      %s41 = scalar_select %p38, %s39, %s40
      %p44 = pneg %p38
      %p45 = scmp.eq.s32.totalorder %s15, 1
      %p46 = por %p44, %p45
      %p47 = scmp.ne.s32.totalorder %s39, %s42
      %p48 = scmp.eq.s32.totalorder %s15, 0
      %p49 = por %p47, %p48
      %p50 = scmp.ne.s32.totalorder %s39, %s42
      %p51 = scmp.eq.s32.totalorder %s20, 1
      %p52 = por %p50, %p51
      %p53 = scmp.ne.s32.totalorder %s42, %s43
      %p54 = scmp.eq.s32.totalorder %s20, 0
      %p55 = por %p53, %p54
      %p56 = scmp.ne.s32.totalorder %s42, %s43
      %p57 = scmp.eq.s32.totalorder %s21, 1
      %p58 = por %p56, %p57
      %p60 = scmp.ne.s32.totalorder %s43, %s59
      %p61 = scmp.eq.s32.totalorder %s21, 0
      %p62 = por %p60, %p61
      %s64 = sadd.s32 %s63, 1
      %p67 = scmp.eq.s32.totalorder %s15, 1
      %p68 = scmp.ne.s32.totalorder %s63, %s65
      %p69 = scmp.eq.s32.totalorder %s15, 0
      %p70 = por %p68, %p69
      %p71 = scmp.ne.s32.totalorder %s63, %s65
      %p72 = scmp.eq.s32.totalorder %s20, 1
      %p73 = por %p71, %p72
      %p74 = scmp.ne.s32.totalorder %s65, %s66
      %p75 = scmp.eq.s32.totalorder %s20, 0
      %p76 = por %p74, %p75
      %p77 = scmp.ne.s32.totalorder %s65, %s66
      %p78 = scmp.eq.s32.totalorder %s21, 1
      %p79 = por %p77, %p78
      %p81 = scmp.ne.s32.totalorder %s66, %s80
      %p82 = scmp.eq.s32.totalorder %s21, 0
      %p83 = por %p81, %p82
      %s84 = ssub.s32 %s22, %s34
      %p85 = scmp.eq.s32.totalorder %s84, 0
      %s87 = sadd.s32 %s86, 1
      %s88 = scalar_select %p85, %s86, %s87
      %p91 = pneg %p85
      %p92 = scmp.eq.s32.totalorder %s15, 1
      %p93 = por %p91, %p92
      %p94 = scmp.ne.s32.totalorder %s86, %s89
      %p95 = scmp.eq.s32.totalorder %s15, 0
      %p96 = por %p94, %p95
      %p97 = scmp.ne.s32.totalorder %s86, %s89
      %p98 = scmp.eq.s32.totalorder %s20, 1
      %p99 = por %p97, %p98
      %p100 = scmp.ne.s32.totalorder %s89, %s90
      %p101 = scmp.eq.s32.totalorder %s20, 0
      %p102 = por %p100, %p101
      %p103 = scmp.ne.s32.totalorder %s89, %s90
      %p104 = scmp.eq.s32.totalorder %s21, 1
      %p105 = por %p103, %p104
      %p107 = scmp.ne.s32.totalorder %s90, %s106
      %p108 = scmp.eq.s32.totalorder %s21, 0
      %p109 = por %p107, %p108
      %p110 = scmp.le.s32.totalorder 1, %s15
      %p111 = scmp.lt.s32.totalorder %s15, 3
      %p112 = pnand %p110, %p111
      %p113 = pneg %p112
      // Predicated region
      $region9: #{tpu_custom_call.1} parent=5 // pred_check
        _
      $region10: #{tpu_custom_call.1} parent=5 // pred_check_branch
        %115 = sbr.rel (%p112) target = $region12
      $region11: #{tpu_custom_call.1} parent=5 // pred_region
        %s116 = ssub.s32 %s15, 1
        // Predicated region
        $region13: #{tpu_custom_call.1} parent=11 // pred_check
          %p117 = pneg %p76
        $region14: #{tpu_custom_call.1} parent=11 // pred_check_branch
          %119 = sbr.rel (%p117) target = $region16
        $region15: #{tpu_custom_call.1} parent=11 // pred_region
          %s121 = ssub.s32 64, 64
          %122 = vsyncadd [#allocation9], %s121
          %s124 = sshll.u32 [#allocation8], 4
          %s125 = int_to_ptr.vmem [resolvable:$true] %s124
          %127 = dma.hbm_to_vmem [thread:$0]  %s1, 64, %s125, [#allocation9]
        $region16: #{tpu_custom_call.1} parent=11 // pred_fallthru
          _
      $region12: #{tpu_custom_call.1} parent=5 // pred_fallthru
        _
      %p128 = scmp.lt.s32.totalorder %s15, 2
      // Predicated region
      $region17: #{tpu_custom_call.1} parent=5 // pred_check
        %p129 = pneg %p128
      $region18: #{tpu_custom_call.1} parent=5 // pred_check_branch
        %131 = sbr.rel (%p129) target = $region20
      $region19: #{tpu_custom_call.1} parent=5 // pred_region
        // Predicated region
        $region21: #{tpu_custom_call.1} parent=19 // pred_check
          %p132 = pneg %p49
        $region22: #{tpu_custom_call.1} parent=19 // pred_check_branch
          %134 = sbr.rel (%p132) target = $region24
        $region23: #{tpu_custom_call.1} parent=19 // pred_region
          %s135 = sand.u32 %s39, 1
          %s136 = scalar_lea.sflag [#allocation6], %s135
          %s137 = sand.u32 %s39, 1
          %s138 = smul.addr %s137, 32
          %s139 = scalar_lea.vmem [#allocation5], %s138
          %s141 = ssub.s32 512, 512
          %142 = vsyncadd %s136, %s141
          %s143 = smul.addr %s22, 8
          %s144 = sadd.s32 %s23, %s143
          %s145 = smul.addr %s144, 64
          %s146 = scalar_lea.hbm %s0, %s145
          %s147 = sshll.u32 %s139, 4
          %s148 = int_to_ptr.vmem [resolvable:$true] %s147
          %153 = dma.hbm_to_vmem [thread:$0]  %s146, 512, %s148, %s136, 64, 64, 4
        $region24: #{tpu_custom_call.1} parent=19 // pred_fallthru
          _
      $region20: #{tpu_custom_call.1} parent=5 // pred_fallthru
        _
      %p154 = scmp.le.s32.totalorder 1, %s15
      %p155 = scmp.lt.s32.totalorder %s15, 3
      %p156 = pnand %p154, %p155
      %p157 = pneg %p156
      // Predicated region
      $region25: #{tpu_custom_call.1} parent=5 // pred_check
        _
      $region26: #{tpu_custom_call.1} parent=5 // pred_check_branch
        %159 = sbr.rel (%p156) target = $region28
      $region27: #{tpu_custom_call.1} parent=5 // pred_region
        %s160 = ssub.s32 %s15, 1
        %s161 = sand.u32 %s42, 1
        %s162 = scalar_lea.sflag [#allocation6], %s161
        %s163 = sand.u32 %s42, 1
        %s164 = smul.addr %s163, 32
        %s165 = scalar_lea.vmem [#allocation5], %s164
        // Predicated region
        $region29: #{tpu_custom_call.1} parent=27 // pred_check
          %p166 = pneg %p55
        $region30: #{tpu_custom_call.1} parent=27 // pred_check_branch
          %168 = sbr.rel (%p166) target = $region32
        $region31: #{tpu_custom_call.1} parent=27 // pred_region
          %169 = dma.done %s162, 512
        $region32: #{tpu_custom_call.1} parent=27 // pred_fallthru
          _
        // Predicated region
        $region33: #{tpu_custom_call.1} parent=27 // pred_check
          %p170 = pneg %p76
        $region34: #{tpu_custom_call.1} parent=27 // pred_check_branch
          %172 = sbr.rel (%p170) target = $region36
        $region35: #{tpu_custom_call.1} parent=27 // pred_region
          %173 = dma.done [#allocation9], 64
        $region36: #{tpu_custom_call.1} parent=27 // pred_fallthru
          _
        %s174 = sand.u32 %s42, 1
        %s175 = scalar_lea.sflag [#allocation6], %s174
        %s176 = sand.u32 %s42, 1
        %s177 = smul.addr %s176, 32
        %s178 = scalar_lea.vmem [#allocation5], %s177
        %p179 = pneg %p55
        %p180 = pneg %p52
        %p181 = pneg %p76
        %p182 = pneg %p73
        %p183 = pneg %p102
        %p184 = pneg %p99
        %s185 = sand.u32 %s89, 1
        %s186 = scalar_lea.sflag [#allocation7], %s185
        %s187 = sand.u32 %s89, 1
        %s188 = smul.addr %s187, 8
        %s189 = scalar_lea.vmem [#allocation10], %s188
        %v191 = vld [vmem:[#allocation8] sm:$0xf]
        %v192 = vld [vmem:[%s165] sm:$0xf]
        %v193 = vld [vmem:[%s165 + $0x4] sm:$0xf]
        %v194 = vld [vmem:[%s165 + $0x8] sm:$0xf]
        %v195 = vld [vmem:[%s165 + $0xc] sm:$0xf]
        %v196 = vld [vmem:[%s165 + $0x10] sm:$0xf]
        %v197 = vld [vmem:[%s165 + $0x14] sm:$0xf]
        %v198 = vld [vmem:[%s165 + $0x18] sm:$0xf]
        %v199 = vld [vmem:[%s165 + $0x1c] sm:$0xf]
        %v208 = vunpack.c.l.b16 %v192
        %v209 = vunpack.c.l.b16 %v193
        %v210 = vunpack.c.l.b16 %v194
        %v211 = vunpack.c.l.b16 %v195
        %v212 = vunpack.c.l.b16 %v196
        %v213 = vunpack.c.l.b16 %v197
        %v214 = vunpack.c.l.b16 %v198
        %v215 = vunpack.c.l.b16 %v199
        %v216 = vpack.c.b16 %v209, %v208
        %v217 = vpack.c.b16 %v211, %v210
        %v218 = vpack.c.b16 %v213, %v212
        %v219 = vpack.c.b16 %v215, %v214
        %vm224 = vcmask 523264
        %v226 = vsel %vm224, %v191, 0
        %228 = vmatprep.subr.bf16.mxu0 0
        %229 = vmatpush1.bf16.msra.mxu0 %v216
        %230 = vmatprep.subr.bf16.mxu0 0
        %231 = vmatpush1.bf16.msra.mxu0 %v217
        %232 = vmatprep.subr.bf16.mxu0 0
        %233 = vmatpush1.bf16.msra.mxu0 %v218
        %234 = vmatprep.subr.bf16.mxu0 0
        %235 = vmatpush1.bf16.msra.mxu0 %v219
        %236 = vmatprep.subr.bf16.mxu0 0
        %237 = vmatpush1.bf16.msra.mxu0 0
        %238 = vmatprep.subr.bf16.mxu0 0
        %239 = vmatpush1.bf16.msra.mxu0 0
        %240 = vmatprep.subr.bf16.mxu0 0
        %241 = vmatpush1.bf16.msra.mxu0 0
        %242 = vmatprep.subr.bf16.mxu0 0
        %243 = vmatpush1.bf16.msra.mxu0 0
        %244 = vmatprep.subr.bf16.mxu0 0
        %245 = vmatpush1.bf16.msra.mxu0 0
        %246 = vmatprep.subr.bf16.mxu0 0
        %247 = vmatpush1.bf16.msra.mxu0 0
        %248 = vmatprep.subr.bf16.mxu0 0
        %249 = vmatpush1.bf16.msra.mxu0 0
        %250 = vmatprep.subr.bf16.mxu0 0
        %251 = vmatpush1.bf16.msra.mxu0 0
        %252 = vmatprep.subr.bf16.mxu0 0
        %253 = vmatpush1.bf16.msra.mxu0 0
        %254 = vmatprep.subr.bf16.mxu0 0
        %255 = vmatpush1.bf16.msra.mxu0 0
        %256 = vmatprep.subr.bf16.mxu0 0
        %257 = vmatpush1.bf16.msra.mxu0 0
        %258 = vmatprep.subr.bf16.mxu0 0
        %259 = vmatpush1.bf16.msra.mxu0 0
        %260 = vmatprep.mubr.bf16.mxu0 0
        %261 = vmatmul.mubr.bf16.gmra.mrb[0].mxu0 %v226
        %v262 = vpop.f32.mrb[0].mxu0
        %v263 = vadd.f32 0.0, %v262
        %v264 = vpop.f32.mrb[0].mxu0
        %v265 = vpop.f32.mrb[0].mxu0
        %v266 = vpop.f32.mrb[0].mxu0
        %267 = vdwg.mxu0
        %s268 = smul.u32 %s25, 8
        %s269 = scalar_lea.vmem [#allocation2], %s268
        %270 = vst.msk [vmem:[%s269] sm:$0xff] %vm224, %v263
        %p271 = scmp.eq.s32.totalorder %s25, 0
        // Predicated region
        $region37: #{tpu_custom_call.1} parent=27 // pred_check
          %p272 = pneg %p271
        $region38: #{tpu_custom_call.1} parent=27 // pred_check_branch
          %274 = sbr.rel (%p272) target = $region40
        $region39: #{tpu_custom_call.1} parent=27 // pred_region
          %vm275 = vcmask 7168
          %276 = vst.msk [vmem:[#allocation3] sm:$0xff] %vm275, 0.0
          %277 = vst.msk [vmem:[#allocation4] sm:$0xff] %vm275, 0.0
        $region40: #{tpu_custom_call.1} parent=27 // pred_fallthru
          _
        %v278 = vld [vmem:[#allocation3] sm:$0xff]
        %v279 = vsel %vm224, %v263, 0.0
        %280 = vadd.xlane.f32.xlu0 %v279
        %v281 = vpop.xlane.xlu0 %280
        %v282 = vadd.f32 %v278, %v281
        %vm283 = vcmask 7168
        %284 = vst.msk [vmem:[#allocation3] sm:$0xff] %vm283, %v282
        %v285 = vld [vmem:[#allocation4] sm:$0xff]
        %v286 = vmul.f32 %v263, %v263
        %v287 = vsel %vm224, %v286, 0.0
        %288 = vadd.xlane.f32.xlu0 %v287
        %v289 = vpop.xlane.xlu0 %288
        %v290 = vadd.f32 %v285, %v289
        %291 = vst.msk [vmem:[#allocation4] sm:$0xff] %vm283, %v290
        // Predicated region
        $region41: #{tpu_custom_call.1} parent=27 // pred_check
          %p292 = pneg %p271
        $region42: #{tpu_custom_call.1} parent=27 // pred_check_branch
          %294 = sbr.rel (%p292) target = $region44
        $region43: #{tpu_custom_call.1} parent=27 // pred_region
          %v295 = vld [vmem:[#allocation3] sm:$0xff]
          %v296 = vmul.f32 %v295, 0.015625
          %v297 = vld [vmem:[#allocation4] sm:$0xff]
          %v298 = vmul.f32 %v297, 0.015625
          %v299 = vmul.f32 %v296, %v296
          %v300 = vsub.f32 %v298, %v299
          %v301 = vmax.f32 %v300, 0.0
          %v302 = vadd.f32 %v301, 1e-05
          %v303 = vrsqrt.pop %v302
          %v304 = vmul.f32 %v296, %v303
          %306 = vset.pattern.permute.xlu0 0
          %307 = vperm.xlu0 %306, %v303
          %v308 = vpop.permute.xlu0 %307
          %311 = vset.pattern.permute.xlu0 0
          %312 = vperm.xlu0 %311, %v304
          %v313 = vpop.permute.xlu0 %312
          %v315 = vld [vmem:[#allocation2] sm:$0xff]
          %v316 = vmul.f32 %v315, %v308
          %v317 = vsub.f32 %v316, %v313
          %vm318 = vcmp.ge.f32.partialorder %v317, 0.0
          %v319 = vmul.f32 %v317, 0.2
          %v320 = vsel %vm318, %v317, %v319
          %321 = vst.msk [vmem:[%s189] sm:$0xff] %vm224, %v320
        $region44: #{tpu_custom_call.1} parent=27 // pred_fallthru
          _
        %s322 = sand.u32 %s89, 1
        %s323 = scalar_lea.sflag [#allocation7], %s322
        %s324 = sand.u32 %s89, 1
        %s325 = smul.addr %s324, 8
        %s326 = scalar_lea.vmem [#allocation10], %s325
        // Predicated region
        $region45: #{tpu_custom_call.1} parent=27 // pred_check
          %p327 = pneg %p99
        $region46: #{tpu_custom_call.1} parent=27 // pred_check_branch
          %329 = sbr.rel (%p327) target = $region48
        $region47: #{tpu_custom_call.1} parent=27 // pred_region
          %s331 = ssub.s32 128, 128
          %332 = vsyncadd %s323, %s331
          %s333 = smul.addr %s24, 128
          %s334 = scalar_lea.hbm %s2, %s333
          %s336 = sshll.u32 %s326, 4
          %s337 = int_to_ptr.vmem [resolvable:$true] %s336
          %339 = dma.vmem_to_hbm [thread:$0]  %s337, 128, %s334, %s323
        $region48: #{tpu_custom_call.1} parent=27 // pred_fallthru
          _
      $region28: #{tpu_custom_call.1} parent=5 // pred_fallthru
        _
      %p340 = scmp.le.s32.totalorder 2, %s15
      // Predicated region
      $region49: #{tpu_custom_call.1} parent=5 // pred_check
        %p341 = pneg %p340
      $region50: #{tpu_custom_call.1} parent=5 // pred_check_branch
        %343 = sbr.rel (%p341) target = $region52
      $region51: #{tpu_custom_call.1} parent=5 // pred_region
        %s344 = ssub.s32 %s15, 2
        // Predicated region
        $region53: #{tpu_custom_call.1} parent=51 // pred_check
          %p345 = pneg %p105
        $region54: #{tpu_custom_call.1} parent=51 // pred_check_branch
          %347 = sbr.rel (%p345) target = $region56
        $region55: #{tpu_custom_call.1} parent=51 // pred_region
          %s348 = sand.u32 %s90, 1
          %s349 = scalar_lea.sflag [#allocation7], %s348
          %s350 = sand.u32 %s90, 1
          %s351 = smul.addr %s350, 8
          %s352 = scalar_lea.vmem [#allocation10], %s351
          %353 = dma.done %s349, 128
        $region56: #{tpu_custom_call.1} parent=51 // pred_fallthru
          _
      $region52: #{tpu_custom_call.1} parent=5 // pred_fallthru
        _
    $region6: #{tpu_custom_call.1} parent=1 // loop_footer
      %s19 = sadd.s32 1, %s15
    $region7: #{tpu_custom_call.1} parent=1 // loop_footer_branch
      %14 = sbr.rel target = $region3
    $region8: #{tpu_custom_call.1} parent=1 // loop_exit
      _
    %354 = vsyncpa [#allocation6], 1
    %s355 = scalar_lea.sflag [#allocation6], 1
    %356 = vsyncpa %s355, 1
    %357 = vsyncpa [#allocation9], 1
    %358 = vsyncpa [#allocation7], 1
    %s359 = scalar_lea.sflag [#allocation7], 1
    %360 = vsyncpa %s359, 1

</llo_original>
